<compile_context>
chip_gen: v7x
topology: tpu7x:2x2x1
jax: 0.10.0
libtpu: 0.0.40
codegen_flags: <defaults>
</compile_context>

<pallas_src>
import functools

import jax
import jax.numpy as jnp
from jax.experimental import pallas as pl
from jax.experimental.pallas import tpu as pltpu

_LANES = 128
_MAX_TILE_ROWS = 4096   # 4096x128 f32 tile = 2 MiB/input; ~9 MiB double-buffered


def _round_up(x, m):
    return ((x + m - 1) // m) * m


def _num_parallel_splits():
    """Use a 2-way 'parallel' grid split only on parts with 2 TensorCores."""
    try:
        kind = jax.devices()[0].device_kind.lower()
    except Exception:
        return 1
    if "v7" in kind or "v4" in kind or "v5p" in kind:
        return 2
    return 1   # v5e / v6e: single TensorCore, a split only adds overhead


def _silog_partial_kernel(est_ref, gt_ref, mask_ref, out_ref, *,
                          tile_rows, blocks_per_outer, rows_total):
    o = pl.program_id(0)   # "parallel" split index
    j = pl.program_id(1)   # streaming reduction index

    @pl.when(j == 0)
    def _init():
        out_ref[...] = jnp.zeros_like(out_ref)

    def _load_mask():
        m = mask_ref[...]
        if m.dtype != jnp.bool_:
            m = m != 0
        return m

    def _accumulate(valid):
        est = est_ref[...]
        gt = gt_ref[...]
        if est.dtype != jnp.float32:
            est = est.astype(jnp.float32)
        if gt.dtype != jnp.float32:
            gt = gt.astype(jnp.float32)
        # One log per element; invalid lanes get ratio=1 -> d=0.  The select
        # discards any inf/NaN coming from masked / out-of-bounds garbage.
        ratio = jnp.where(valid, est / gt, 1.0)
        d = jnp.log(ratio)
        folds = tile_rows // 8
        d_f = d.reshape(folds, 8, _LANES).sum(axis=0)
        d2_f = (d * d).reshape(folds, 8, _LANES).sum(axis=0)
        c_f = valid.astype(jnp.float32).reshape(folds, 8, _LANES).sum(axis=0)
        out_ref[0, 0] += d_f
        out_ref[0, 1] += d2_f
        out_ref[0, 2] += c_f

    # Logical (unclamped) first row of this block.  Blocks that are fully in
    # range skip the iota masking entirely; edge / clamped blocks mask rows
    # at/after rows_total so they contribute nothing.
    row0 = (o * blocks_per_outer + j) * tile_rows
    is_full = row0 + tile_rows <= rows_total

    @pl.when(is_full)
    def _full_block():
        _accumulate(_load_mask())

    @pl.when(jnp.logical_not(is_full))
    def _edge_block():
        row_idx = jax.lax.broadcasted_iota(jnp.int32, (tile_rows, _LANES), 0) + row0
        _accumulate(jnp.logical_and(_load_mask(), row_idx < rows_total))


def _masked_log_diff_sums(est, gt, msk):
    """Tiny plain-jnp partials (sum d, sum d^2, count) for the <128-elem tail."""
    est = est.astype(jnp.float32)
    gt = gt.astype(jnp.float32)
    m = msk if msk.dtype == jnp.bool_ else (msk != 0)
    d = jnp.where(m, jnp.log(est) - jnp.log(gt), 0.0)
    return jnp.sum(d), jnp.sum(d * d), jnp.sum(m.astype(jnp.float32))


def silog_loss(depth_est, depth_gt, mask, variance_focus=0.85):
    """Pallas TPU implementation of silog_loss.forward.

    depth_est, depth_gt: float arrays of any shape/dtype (e.g. NCHW, f32/bf16).
    mask: boolean (or numeric {0,1}) array of the same shape.
    Returns a float32 scalar.
    """
    est = jnp.asarray(depth_est).reshape(-1)
    gt = jnp.asarray(depth_gt).reshape(-1)
    msk = jnp.asarray(mask).reshape(-1)

    n = est.shape[0]
    rem = n % _LANES
    bulk = n - rem

    tail_sd = jnp.float32(0.0)
    tail_sd2 = jnp.float32(0.0)
    tail_cnt = jnp.float32(0.0)
    if rem:
        # Sub-128 tail: tiny jnp partial sum; avoids padding all three arrays.
        tail_sd, tail_sd2, tail_cnt = _masked_log_diff_sums(
            est[bulk:], gt[bulk:], msk[bulk:])

    if bulk == 0:
        sum_d, sum_d2, cnt = tail_sd, tail_sd2, tail_cnt
    else:
        rows = bulk // _LANES
        if rem:
            est_b, gt_b, msk_b = est[:bulk], gt[:bulk], msk[:bulk]
        else:
            est_b, gt_b, msk_b = est, gt, msk      # free bitcast reshape below
        est2 = est_b.reshape(rows, _LANES)
        gt2 = gt_b.reshape(rows, _LANES)
        msk2 = msk_b.reshape(rows, _LANES)

        n_split = _num_parallel_splits()
        tile_rows = min(_MAX_TILE_ROWS, _round_up(rows, 8))
        blocks_total = pl.cdiv(rows, tile_rows)
        if blocks_total < n_split:
            n_split = 1
        blocks_per_outer = pl.cdiv(blocks_total, n_split)

        if n_split * blocks_per_outer == blocks_total:
            def in_map(o, j):
                return (o * blocks_per_outer + j, 0)
        else:
            # Clamp fully out-of-bounds blocks (odd split) so the DMA stays
            # in-bounds; their contribution is zeroed in-kernel via row0.
            def in_map(o, j):
                return (jnp.minimum(o * blocks_per_outer + j, blocks_total - 1), 0)

        in_spec = pl.BlockSpec((tile_rows, _LANES), in_map)

        bytes_in = (est2.dtype.itemsize + gt2.dtype.itemsize
                    + msk2.dtype.itemsize) * bulk
        cost = pl.CostEstimate(
            flops=8 * bulk,
            transcendentals=2 * bulk,
            bytes_accessed=bytes_in + n_split * 3 * 8 * _LANES * 4)

        partials = pl.pallas_call(
            functools.partial(_silog_partial_kernel,
                              tile_rows=tile_rows,
                              blocks_per_outer=blocks_per_outer,
                              rows_total=rows),
            out_shape=jax.ShapeDtypeStruct((n_split, 3, 8, _LANES), jnp.float32),
            grid_spec=pltpu.PrefetchScalarGridSpec(
                num_scalar_prefetch=0,
                grid=(n_split, blocks_per_outer),
                in_specs=[in_spec, in_spec, in_spec],
                out_specs=pl.BlockSpec((1, 3, 8, _LANES),
                                       lambda o, j: (o, 0, 0, 0)),
            ),
            compiler_params=pltpu.CompilerParams(
                dimension_semantics=("parallel", "arbitrary"),
                vmem_limit_bytes=32 * 1024 * 1024,
            ),
            cost_estimate=cost,
        )(est2, gt2, msk2)

        sums = jnp.sum(partials, axis=(0, 2, 3))   # (3,): sum d, sum d^2, count
        sum_d = sums[0] + tail_sd
        sum_d2 = sums[1] + tail_sd2
        cnt = sums[2] + tail_cnt

    # cnt == 0 (all-false mask) yields NaN, matching the PyTorch reference.
    mean_d = sum_d / cnt
    return jnp.sqrt(sum_d2 / cnt - variance_focus * mean_d * mean_d) * 10.0


def _silog_ref(depth_est, depth_gt, mask, variance_focus):
    d = jnp.where(mask, jnp.log(depth_est) - jnp.log(depth_gt), 0.0)
    n = jnp.sum(mask.astype(jnp.float32))
    mean_d = jnp.sum(d) / n
    mean_d2 = jnp.sum(d * d) / n
    return jnp.sqrt(mean_d2 - variance_focus * mean_d ** 2) * 10.0


if __name__ == "__main__":
    key = jax.random.PRNGKey(0)
    k1, k2, k3, k4, k5, k6 = jax.random.split(key, 6)

    variance_focus = 0.85   # deterministic "init" of the module's parameter

    # Case 1: NCHW f32, element count a multiple of 128 (zero-copy fast path).
    B, C, H, W = 2, 4, 16, 16
    depth_est = jax.random.uniform(k1, (B, C, H, W), jnp.float32, 0.1, 10.0)
    depth_gt = jax.random.uniform(k2, (B, C, H, W), jnp.float32, 0.1, 10.0)
    mask = jax.random.uniform(k3, (B, C, H, W), jnp.float32) > 0.3

    loss = silog_loss(depth_est, depth_gt, mask, variance_focus)
    jax.block_until_ready(loss)
    ref = _silog_ref(depth_est, depth_gt, mask, variance_focus)
    assert jnp.allclose(loss, ref, rtol=1e-4, atol=1e-4), (loss, ref)

    # Case 2: bf16 inputs, element count NOT a multiple of 128 (tail path,
    # in-kernel upcast, edge-block masking).
    shp = (3, 1, 7, 11)
    est_b = jax.random.uniform(k4, shp, jnp.float32, 0.1, 10.0).astype(jnp.bfloat16)
    gt_b = jax.random.uniform(k5, shp, jnp.float32, 0.1, 10.0).astype(jnp.bfloat16)
    msk_b = jax.random.uniform(k6, shp, jnp.float32) > 0.3

    loss2 = silog_loss(est_b, gt_b, msk_b, variance_focus)
    jax.block_until_ready(loss2)
    ref2 = _silog_ref(est_b.astype(jnp.float32), gt_b.astype(jnp.float32),
                      msk_b, variance_focus)
    assert jnp.allclose(loss2, ref2, rtol=1e-4, atol=1e-4), (loss2, ref2)

    print("KERNEL_OK")
</pallas_src>

<mosaic_0001>
module attributes {stable_mosaic.version = 11 : i64} {
  func.func @_silog_partial_kernel(%arg0: i32, %arg1: i32, %arg2: memref<16x128xf32, #tpu.memory_space<vmem>>, %arg3: memref<16x128xf32, #tpu.memory_space<vmem>>, %arg4: memref<16x128xi32, #tpu.memory_space<vmem>>, %arg5: memref<1x3x8x128xf32, #tpu.memory_space<vmem>>) attributes {dimension_semantics = [#tpu.dimension_semantics<parallel>, #tpu.dimension_semantics<arbitrary>], iteration_bounds = array<i64: 1, 1>, scalar_prefetch = 0 : i64, scratch_operands = 0 : i64, tpu.core_type = #tpu.core_type<tc>, window_params = [{transform_indices = @transform_0, window_bounds = array<i64: 16, 128>}, {transform_indices = @transform_1, window_bounds = array<i64: 16, 128>}, {transform_indices = @transform_2, window_bounds = array<i64: 16, 128>}, {transform_indices = @transform_3, window_bounds = array<i64: 1, 3, 8, 128>}]} {
    %c0_i32 = arith.constant 0 : i32
    %0 = arith.cmpi eq, %arg1, %c0_i32 : i32
    %1 = arith.extui %0 : i1 to i32
    %c0_i32_0 = arith.constant 0 : i32
    %2 = arith.cmpi ne, %1, %c0_i32_0 : i32
    scf.if %2 {
      %cst = arith.constant 0.000000e+00 : f32
      %13 = vector.broadcast %cst : f32 to vector<1x3x8x128xf32>
      %c0 = arith.constant 0 : index
      %c0_5 = arith.constant 0 : index
      %c0_6 = arith.constant 0 : index
      %c0_7 = arith.constant 0 : index
      %14 = vector.load %arg5[%c0, %c0_5, %c0_6, %c0_7] : memref<1x3x8x128xf32, #tpu.memory_space<vmem>>, vector<1x3x8x128xf32>
      tpu.vector_store %arg5[%c0, %c0_5, %c0_6, %c0_7], %13 {strides = array<i32>} : memref<1x3x8x128xf32, #tpu.memory_space<vmem>>, vector<1x3x8x128xf32>,
    } else {
    }
    %c1_i32 = arith.constant 1 : i32
    %3 = arith.muli %arg0, %c1_i32 : i32
    %4 = arith.addi %3, %arg1 : i32
    %c16_i32 = arith.constant 16 : i32
    %5 = arith.muli %4, %c16_i32 : i32
    %c16_i32_1 = arith.constant 16 : i32
    %6 = arith.addi %5, %c16_i32_1 : i32
    %c16_i32_2 = arith.constant 16 : i32
    %7 = arith.cmpi sle, %6, %c16_i32_2 : i32
    %8 = arith.extui %7 : i1 to i32
    %c0_i32_3 = arith.constant 0 : i32
    %9 = arith.cmpi ne, %8, %c0_i32_3 : i32
    scf.if %9 {
      %c0 = arith.constant 0 : index
      %c0_5 = arith.constant 0 : index
      %13 = vector.load %arg4[%c0, %c0_5] : memref<16x128xi32, #tpu.memory_space<vmem>>, vector<16x128xi32>
      %cst = arith.constant dense<0> : vector<16x128xi32>
      %14 = arith.cmpi ne, %13, %cst : vector<16x128xi32>
      %c0_6 = arith.constant 0 : index
      %c0_7 = arith.constant 0 : index
      %15 = vector.load %arg2[%c0_6, %c0_7] : memref<16x128xf32, #tpu.memory_space<vmem>>, vector<16x128xf32>
      %c0_8 = arith.constant 0 : index
      %c0_9 = arith.constant 0 : index
      %16 = vector.load %arg3[%c0_8, %c0_9] : memref<16x128xf32, #tpu.memory_space<vmem>>, vector<16x128xf32>
      %17 = arith.divf %15, %16 : vector<16x128xf32>
      %cst_10 = arith.constant 1.000000e+00 : f32
      %18 = vector.broadcast %cst_10 : f32 to vector<16x128xf32>
      %19 = arith.select %14, %17, %18 : vector<16x128xi1>, vector<16x128xf32>
      %20 = math.log %19 : vector<16x128xf32>
      %21 = vector.shape_cast %20 : vector<16x128xf32> to vector<2x8x128xf32>
      %cst_11 = arith.constant dense<0.000000e+00> : vector<8x128xf32>
      %22 = vector.multi_reduction <add>, %21, %cst_11 [0] : vector<2x8x128xf32> to vector<8x128xf32>
      %23 = arith.mulf %20, %20 : vector<16x128xf32>
      %24 = vector.shape_cast %23 : vector<16x128xf32> to vector<2x8x128xf32>
      %cst_12 = arith.constant dense<0.000000e+00> : vector<8x128xf32>
      %25 = vector.multi_reduction <add>, %24, %cst_12 [0] : vector<2x8x128xf32> to vector<8x128xf32>
      %26 = arith.extui %14 : vector<16x128xi1> to vector<16x128xi32>
      %27 = arith.sitofp %26 : vector<16x128xi32> to vector<16x128xf32>
      %28 = vector.shape_cast %27 : vector<16x128xf32> to vector<2x8x128xf32>
      %cst_13 = arith.constant dense<0.000000e+00> : vector<8x128xf32>
      %29 = vector.multi_reduction <add>, %28, %cst_13 [0] : vector<2x8x128xf32> to vector<8x128xf32>
      %c0_14 = arith.constant 0 : index
      %c0_15 = arith.constant 0 : index
      %c0_16 = arith.constant 0 : index
      %c0_17 = arith.constant 0 : index
      %30 = vector.load %arg5[%c0_14, %c0_15, %c0_16, %c0_17] : memref<1x3x8x128xf32, #tpu.memory_space<vmem>>, vector<1x1x8x128xf32>
      %31 = vector.shape_cast %30 : vector<1x1x8x128xf32> to vector<8x128xf32>
      %32 = arith.addf %31, %22 : vector<8x128xf32>
      %c0_18 = arith.constant 0 : index
      %c0_19 = arith.constant 0 : index
      %c0_20 = arith.constant 0 : index
      %c0_21 = arith.constant 0 : index
      %33 = vector.load %arg5[%c0_18, %c0_19, %c0_20, %c0_21] : memref<1x3x8x128xf32, #tpu.memory_space<vmem>>, vector<1x1x8x128xf32>
      %34 = vector.shape_cast %33 : vector<1x1x8x128xf32> to vector<8x128xf32>
      %35 = vector.shape_cast %32 : vector<8x128xf32> to vector<1x1x8x128xf32>
      tpu.vector_store %arg5[%c0_18, %c0_19, %c0_20, %c0_21], %35 {strides = array<i32>} : memref<1x3x8x128xf32, #tpu.memory_space<vmem>>, vector<1x1x8x128xf32>,
      %c0_22 = arith.constant 0 : index
      %c1 = arith.constant 1 : index
      %c0_23 = arith.constant 0 : index
      %c0_24 = arith.constant 0 : index
      %36 = vector.load %arg5[%c0_22, %c1, %c0_23, %c0_24] : memref<1x3x8x128xf32, #tpu.memory_space<vmem>>, vector<1x1x8x128xf32>
      %37 = vector.shape_cast %36 : vector<1x1x8x128xf32> to vector<8x128xf32>
      %38 = arith.addf %37, %25 : vector<8x128xf32>
      %c0_25 = arith.constant 0 : index
      %c1_26 = arith.constant 1 : index
      %c0_27 = arith.constant 0 : index
      %c0_28 = arith.constant 0 : index
      %39 = vector.load %arg5[%c0_25, %c1_26, %c0_27, %c0_28] : memref<1x3x8x128xf32, #tpu.memory_space<vmem>>, vector<1x1x8x128xf32>
      %40 = vector.shape_cast %39 : vector<1x1x8x128xf32> to vector<8x128xf32>
      %41 = vector.shape_cast %38 : vector<8x128xf32> to vector<1x1x8x128xf32>
      tpu.vector_store %arg5[%c0_25, %c1_26, %c0_27, %c0_28], %41 {strides = array<i32>} : memref<1x3x8x128xf32, #tpu.memory_space<vmem>>, vector<1x1x8x128xf32>,
      %c0_29 = arith.constant 0 : index
      %c2 = arith.constant 2 : index
      %c0_30 = arith.constant 0 : index
      %c0_31 = arith.constant 0 : index
      %42 = vector.load %arg5[%c0_29, %c2, %c0_30, %c0_31] : memref<1x3x8x128xf32, #tpu.memory_space<vmem>>, vector<1x1x8x128xf32>
      %43 = vector.shape_cast %42 : vector<1x1x8x128xf32> to vector<8x128xf32>
      %44 = arith.addf %43, %29 : vector<8x128xf32>
      %c0_32 = arith.constant 0 : index
      %c2_33 = arith.constant 2 : index
      %c0_34 = arith.constant 0 : index
      %c0_35 = arith.constant 0 : index
      %45 = vector.load %arg5[%c0_32, %c2_33, %c0_34, %c0_35] : memref<1x3x8x128xf32, #tpu.memory_space<vmem>>, vector<1x1x8x128xf32>
      %46 = vector.shape_cast %45 : vector<1x1x8x128xf32> to vector<8x128xf32>
      %47 = vector.shape_cast %44 : vector<8x128xf32> to vector<1x1x8x128xf32>
      tpu.vector_store %arg5[%c0_32, %c2_33, %c0_34, %c0_35], %47 {strides = array<i32>} : memref<1x3x8x128xf32, #tpu.memory_space<vmem>>, vector<1x1x8x128xf32>,
    } else {
    }
    %true = arith.constant true
    %10 = arith.xori %7, %true : i1
    %11 = arith.extui %10 : i1 to i32
    %c0_i32_4 = arith.constant 0 : i32
    %12 = arith.cmpi ne, %11, %c0_i32_4 : i32
    scf.if %12 {
      %13 = tpu.iota {dimensions = array<i32: 0>} : vector<16x128xi32>
      %14 = vector.broadcast %5 : i32 to vector<16x128xi32>
      %15 = arith.addi %13, %14 : vector<16x128xi32>
      %c0 = arith.constant 0 : index
      %c0_5 = arith.constant 0 : index
      %16 = vector.load %arg4[%c0, %c0_5] : memref<16x128xi32, #tpu.memory_space<vmem>>, vector<16x128xi32>
      %cst = arith.constant dense<0> : vector<16x128xi32>
      %17 = arith.cmpi ne, %16, %cst : vector<16x128xi32>
      %c16_i32_6 = arith.constant 16 : i32
      %18 = vector.broadcast %c16_i32_6 : i32 to vector<16x128xi32>
      %19 = arith.cmpi slt, %15, %18 : vector<16x128xi32>
      %20 = arith.andi %17, %19 : vector<16x128xi1>
      %c0_7 = arith.constant 0 : index
      %c0_8 = arith.constant 0 : index
      %21 = vector.load %arg2[%c0_7, %c0_8] : memref<16x128xf32, #tpu.memory_space<vmem>>, vector<16x128xf32>
      %c0_9 = arith.constant 0 : index
      %c0_10 = arith.constant 0 : index
      %22 = vector.load %arg3[%c0_9, %c0_10] : memref<16x128xf32, #tpu.memory_space<vmem>>, vector<16x128xf32>
      %23 = arith.divf %21, %22 : vector<16x128xf32>
      %cst_11 = arith.constant 1.000000e+00 : f32
      %24 = vector.broadcast %cst_11 : f32 to vector<16x128xf32>
      %25 = arith.select %20, %23, %24 : vector<16x128xi1>, vector<16x128xf32>
      %26 = math.log %25 : vector<16x128xf32>
      %27 = vector.shape_cast %26 : vector<16x128xf32> to vector<2x8x128xf32>
      %cst_12 = arith.constant dense<0.000000e+00> : vector<8x128xf32>
      %28 = vector.multi_reduction <add>, %27, %cst_12 [0] : vector<2x8x128xf32> to vector<8x128xf32>
      %29 = arith.mulf %26, %26 : vector<16x128xf32>
      %30 = vector.shape_cast %29 : vector<16x128xf32> to vector<2x8x128xf32>
      %cst_13 = arith.constant dense<0.000000e+00> : vector<8x128xf32>
      %31 = vector.multi_reduction <add>, %30, %cst_13 [0] : vector<2x8x128xf32> to vector<8x128xf32>
      %32 = arith.extui %20 : vector<16x128xi1> to vector<16x128xi32>
      %33 = arith.sitofp %32 : vector<16x128xi32> to vector<16x128xf32>
      %34 = vector.shape_cast %33 : vector<16x128xf32> to vector<2x8x128xf32>
      %cst_14 = arith.constant dense<0.000000e+00> : vector<8x128xf32>
      %35 = vector.multi_reduction <add>, %34, %cst_14 [0] : vector<2x8x128xf32> to vector<8x128xf32>
      %c0_15 = arith.constant 0 : index
      %c0_16 = arith.constant 0 : index
      %c0_17 = arith.constant 0 : index
      %c0_18 = arith.constant 0 : index
      %36 = vector.load %arg5[%c0_15, %c0_16, %c0_17, %c0_18] : memref<1x3x8x128xf32, #tpu.memory_space<vmem>>, vector<1x1x8x128xf32>
      %37 = vector.shape_cast %36 : vector<1x1x8x128xf32> to vector<8x128xf32>
      %38 = arith.addf %37, %28 : vector<8x128xf32>
      %c0_19 = arith.constant 0 : index
      %c0_20 = arith.constant 0 : index
      %c0_21 = arith.constant 0 : index
      %c0_22 = arith.constant 0 : index
      %39 = vector.load %arg5[%c0_19, %c0_20, %c0_21, %c0_22] : memref<1x3x8x128xf32, #tpu.memory_space<vmem>>, vector<1x1x8x128xf32>
      %40 = vector.shape_cast %39 : vector<1x1x8x128xf32> to vector<8x128xf32>
      %41 = vector.shape_cast %38 : vector<8x128xf32> to vector<1x1x8x128xf32>
      tpu.vector_store %arg5[%c0_19, %c0_20, %c0_21, %c0_22], %41 {strides = array<i32>} : memref<1x3x8x128xf32, #tpu.memory_space<vmem>>, vector<1x1x8x128xf32>,
      %c0_23 = arith.constant 0 : index
      %c1 = arith.constant 1 : index
      %c0_24 = arith.constant 0 : index
      %c0_25 = arith.constant 0 : index
      %42 = vector.load %arg5[%c0_23, %c1, %c0_24, %c0_25] : memref<1x3x8x128xf32, #tpu.memory_space<vmem>>, vector<1x1x8x128xf32>
      %43 = vector.shape_cast %42 : vector<1x1x8x128xf32> to vector<8x128xf32>
      %44 = arith.addf %43, %31 : vector<8x128xf32>
      %c0_26 = arith.constant 0 : index
      %c1_27 = arith.constant 1 : index
      %c0_28 = arith.constant 0 : index
      %c0_29 = arith.constant 0 : index
      %45 = vector.load %arg5[%c0_26, %c1_27, %c0_28, %c0_29] : memref<1x3x8x128xf32, #tpu.memory_space<vmem>>, vector<1x1x8x128xf32>
      %46 = vector.shape_cast %45 : vector<1x1x8x128xf32> to vector<8x128xf32>
      %47 = vector.shape_cast %44 : vector<8x128xf32> to vector<1x1x8x128xf32>
      tpu.vector_store %arg5[%c0_26, %c1_27, %c0_28, %c0_29], %47 {strides = array<i32>} : memref<1x3x8x128xf32, #tpu.memory_space<vmem>>, vector<1x1x8x128xf32>,
      %c0_30 = arith.constant 0 : index
      %c2 = arith.constant 2 : index
      %c0_31 = arith.constant 0 : index
      %c0_32 = arith.constant 0 : index
      %48 = vector.load %arg5[%c0_30, %c2, %c0_31, %c0_32] : memref<1x3x8x128xf32, #tpu.memory_space<vmem>>, vector<1x1x8x128xf32>
      %49 = vector.shape_cast %48 : vector<1x1x8x128xf32> to vector<8x128xf32>
      %50 = arith.addf %49, %35 : vector<8x128xf32>
      %c0_33 = arith.constant 0 : index
      %c2_34 = arith.constant 2 : index
      %c0_35 = arith.constant 0 : index
      %c0_36 = arith.constant 0 : index
      %51 = vector.load %arg5[%c0_33, %c2_34, %c0_35, %c0_36] : memref<1x3x8x128xf32, #tpu.memory_space<vmem>>, vector<1x1x8x128xf32>
      %52 = vector.shape_cast %51 : vector<1x1x8x128xf32> to vector<8x128xf32>
      %53 = vector.shape_cast %50 : vector<8x128xf32> to vector<1x1x8x128xf32>
      tpu.vector_store %arg5[%c0_33, %c2_34, %c0_35, %c0_36], %53 {strides = array<i32>} : memref<1x3x8x128xf32, #tpu.memory_space<vmem>>, vector<1x1x8x128xf32>,
    } else {
    }
    return
  }
  func.func @transform_0(%arg0: i32, %arg1: i32) -> (i32, i32) {
    %c1_i32 = arith.constant 1 : i32
    %0 = arith.muli %arg0, %c1_i32 : i32
    %1 = arith.addi %0, %arg1 : i32
    %c0_i32 = arith.constant 0 : i32
    %c0_i32_0 = arith.constant 0 : i32
    return %1, %c0_i32 : i32, i32
  }
  func.func @transform_1(%arg0: i32, %arg1: i32) -> (i32, i32) {
    %c1_i32 = arith.constant 1 : i32
    %0 = arith.muli %arg0, %c1_i32 : i32
    %1 = arith.addi %0, %arg1 : i32
    %c0_i32 = arith.constant 0 : i32
    %c0_i32_0 = arith.constant 0 : i32
    return %1, %c0_i32 : i32, i32
  }
  func.func @transform_2(%arg0: i32, %arg1: i32) -> (i32, i32) {
    %c1_i32 = arith.constant 1 : i32
    %0 = arith.muli %arg0, %c1_i32 : i32
    %1 = arith.addi %0, %arg1 : i32
    %c0_i32 = arith.constant 0 : i32
    %c0_i32_0 = arith.constant 0 : i32
    return %1, %c0_i32 : i32, i32
  }
  func.func @transform_3(%arg0: i32, %arg1: i32) -> (i32, i32, i32, i32) {
    %c0_i32 = arith.constant 0 : i32
    %c0_i32_0 = arith.constant 0 : i32
    %c0_i32_1 = arith.constant 0 : i32
    %c0_i32_2 = arith.constant 0 : i32
    return %arg0, %c0_i32, %c0_i32_0, %c0_i32_1 : i32, i32, i32, i32
  }
}

</mosaic_0001>

<llo_original>
// kernel: tpu_custom_call.1
$region0: #{tpu_custom_call.1}
  #allocation0 [shape = 'u32[]', space=smem, size = 0x4, offset = 0x4, fixed_abs, tag = 'smem constant byte address 0x4 - core index']
  #allocation1 [shape = 'u32[144,128]{1,0:T(1,128)}', space=vmem, size = 0x12000, scoped, tag = 'internal scratch']
  %s0 = inlined_call_operand.vmem [shape: f32[16,128], index: 0, kind: input, shape index: {}]
  %s1 = inlined_call_operand.hbm [shape: f32[16,128], index: 1, kind: input, shape index: {}]
  %s2 = inlined_call_operand.vmem [shape: s32[16,128], index: 2, kind: input, shape index: {}]
  %s3 = inlined_call_operand.hbm [shape: f32[1,3,8,128], index: 3, kind: output, shape index: {}]
  %s4 = sld [smem:[#allocation0]]
  $region38: #{tpu_custom_call.1} parent=0
    _
  %s6 = ssub.s32 1, %s4
  %s7 = scalar_select 0, %s6, %s4
  $region1: #{tpu_custom_call.1} parent=0
    #allocation2 [shape = 'u8[8192]{0}', space=vmem, size = 0x2000, scoped, tag = 'input window, operand 1, single buffered']
    #allocation3 [shape = 's32[1]{0}', space=sflag, size = 0x4, scoped, tag = 'scoped memory for tpu_custom_call.1']
    #allocation4 [shape = 's32[1]{0}', space=sflag, size = 0x4, scoped, tag = 'scoped memory for tpu_custom_call.1']
    #allocation5 [shape = 'u8[12288]{0}', space=vmem, size = 0x3000, scoped, tag = 'output window, operand 0, single buffered']
    %8 = vsyncpa [#allocation3], 0
    %9 = vsyncpa [#allocation4], 0
    // Predicated region
    $region2: #{tpu_custom_call.1} parent=1 // pred_check
      _
    $region3: #{tpu_custom_call.1} parent=1 // pred_check_branch
      %11 = sbr.rel (0) target = $region5
    $region4: #{tpu_custom_call.1} parent=1 // pred_region
      %s12 = sadd.s32 0, 0
      %s13 = smul.u32 2, %s12
      %p14 = scmp.lt.s32.totalorder %s13, 1
      %s15 = scalar_select %p14, %s13, 1
      %s16 = smul.addr %s15, 8
      %s17 = scalar_lea.vmem %s0, %s16
      %s18 = sadd.s32 0, 0
      %s19 = smul.u32 2, %s18
    $region5: #{tpu_custom_call.1} parent=1 // pred_fallthru
      _
    // Predicated region
    $region6: #{tpu_custom_call.1} parent=1 // pred_check
      _
    $region7: #{tpu_custom_call.1} parent=1 // pred_check_branch
      %21 = sbr.rel (0) target = $region9
    $region8: #{tpu_custom_call.1} parent=1 // pred_region
      %s22 = sadd.s32 0, 0
      %s23 = smul.u32 2, %s22
      %s25 = ssub.s32 256, 256
      %26 = vsyncadd [#allocation3], %s25
      %s27 = smul.addr %s23, 128
      %s28 = scalar_lea.hbm %s1, %s27
      %s29 = sshll.u32 [#allocation2], 4
      %s30 = int_to_ptr.vmem [resolvable:$true] %s29
      %35 = dma.hbm_to_vmem [thread:$0]  %s28, 256, %s30, [#allocation3], 128, 128, 8
    $region9: #{tpu_custom_call.1} parent=1 // pred_fallthru
      _
    // Predicated region
    $region10: #{tpu_custom_call.1} parent=1 // pred_check
      _
    $region11: #{tpu_custom_call.1} parent=1 // pred_check_branch
      %37 = sbr.rel (0) target = $region13
    $region12: #{tpu_custom_call.1} parent=1 // pred_region
      %s38 = sadd.s32 0, 0
      %s39 = smul.u32 2, %s38
      %p40 = scmp.lt.s32.totalorder %s39, 1
      %s41 = scalar_select %p40, %s39, 1
      %s42 = smul.addr %s41, 8
      %s43 = scalar_lea.vmem %s2, %s42
      %s44 = sadd.s32 0, 0
      %s45 = smul.u32 2, %s44
    $region13: #{tpu_custom_call.1} parent=1 // pred_fallthru
      _
    // Predicated region
    $region14: #{tpu_custom_call.1} parent=1 // pred_check
      _
    $region15: #{tpu_custom_call.1} parent=1 // pred_check_branch
      %47 = sbr.rel (0) target = $region17
    $region16: #{tpu_custom_call.1} parent=1 // pred_region
      %48 = dma.done [#allocation3], 256
    $region17: #{tpu_custom_call.1} parent=1 // pred_fallthru
      _
    %s49 = sadd.s32 0, 0
    %s50 = smul.u32 2, %s49
    %p51 = scmp.lt.s32.totalorder %s50, 1
    %s52 = scalar_select %p51, %s50, 1
    %s53 = smul.addr %s52, 8
    %s54 = scalar_lea.vmem %s0, %s53
    %s55 = sadd.s32 0, 0
    %s56 = smul.u32 2, %s55
    %p57 = scmp.lt.s32.totalorder %s56, 1
    %s58 = scalar_select %p57, %s56, 1
    %s59 = smul.addr %s58, 8
    %s60 = scalar_lea.vmem %s2, %s59
    %s61 = sadd.s32 0, 0
    %s62 = smul.u32 2, %s61
    %p63 = scmp.lt.s32.totalorder %s62, 1
    %s64 = scalar_select %p63, %s62, 1
    %s65 = smul.addr %s64, 8
    %s66 = scalar_lea.vmem %s0, %s65
    %s67 = sadd.s32 0, 0
    %s68 = smul.u32 2, %s67
    %s69 = sadd.s32 0, 0
    %s70 = smul.u32 2, %s69
    %s71 = sadd.s32 0, 0
    %s72 = smul.u32 2, %s71
    %p73 = scmp.lt.s32.totalorder %s72, 1
    %s74 = scalar_select %p73, %s72, 1
    %s75 = smul.addr %s74, 8
    %s76 = scalar_lea.vmem %s2, %s75
    %s77 = sadd.s32 0, 0
    %s78 = smul.u32 2, %s77
    %p79 = scmp.eq.s32.totalorder 0, 0
    // Predicated region
    $region18: #{tpu_custom_call.1} parent=1 // pred_check
      %p80 = pneg %p79
    $region19: #{tpu_custom_call.1} parent=1 // pred_check_branch
      %82 = sbr.rel (%p80) target = $region21
    $region20: #{tpu_custom_call.1} parent=1 // pred_region
      %83 = vst [vmem:[#allocation5] sm:$0xff] 0.0
      %84 = vst [vmem:[#allocation5 + $0x8] sm:$0xff] 0.0
      %85 = vst [vmem:[#allocation5 + $0x10] sm:$0xff] 0.0
    $region21: #{tpu_custom_call.1} parent=1 // pred_fallthru
      _
    %s86 = sadd.s32 0, 0
    %s87 = smul.u32 %s86, 16
    %s88 = sadd.s32 %s87, 16
    %p89 = scmp.le.s32.totalorder %s88, 16
    // Predicated region
    $region22: #{tpu_custom_call.1} parent=1 // pred_check
      %p90 = pneg %p89
    $region23: #{tpu_custom_call.1} parent=1 // pred_check_branch
      %92 = sbr.rel (%p90) target = $region25
    $region24: #{tpu_custom_call.1} parent=1 // pred_region
      %v93 = vld [vmem:[%s76] sm:$0xff]
      %v94 = vld [vmem:[%s76 + $0x8] sm:$0xff]
      %vm95 = vcmp.ne.s32.totalorder %v93, 0
      %vm96 = vcmp.ne.s32.totalorder %v94, 0
      %v97 = vld [vmem:[%s66] sm:$0xff]
      %v98 = vld [vmem:[%s66 + $0x8] sm:$0xff]
      %v99 = vld [vmem:[#allocation2] sm:$0xff]
      %v100 = vld [vmem:[#allocation2 + $0x8] sm:$0xff]
      %v101 = vrcp.pop %v99
      %v102 = vmul.f32 %v97, %v101
      %v103 = vrcp.pop %v100
      %v104 = vmul.f32 %v98, %v103
      %v105 = vsel %vm95, %v102, 1.0
      %v106 = vsel %vm96, %v104, 1.0
      %v107 = vlog2.pop %v105
      %v108 = vmul.f32 %v107, 0.6931472
      %v109 = vlog2.pop %v106
      %v110 = vmul.f32 %v109, 0.6931472
      %v111 = vadd.f32 %v108, %v110
      %v112 = vmul.f32 %v108, %v108
      %v113 = vmul.f32 %v110, %v110
      %v114 = vadd.f32 %v112, %v113
      %v115 = vsel %vm95, 1, 0
      %v116 = vsel %vm96, 1, 0
      %v117 = vcvt.s32.f32 %v115
      %v118 = vcvt.s32.f32 %v116
      %v119 = vadd.f32 %v117, %v118
      %v120 = vld [vmem:[#allocation5] sm:$0xff]
      %v121 = vadd.f32 %v120, %v111
      %122 = vst [vmem:[#allocation5] sm:$0xff] %v121
      %s123 = scalar_lea.vmem [#allocation5], 8
      %v124 = vld [vmem:[%s123] sm:$0xff]
      %v125 = vadd.f32 %v124, %v114
      %126 = vst [vmem:[%s123] sm:$0xff] %v125
      %s127 = scalar_lea.vmem [#allocation5], 16
      %v128 = vld [vmem:[%s127] sm:$0xff]
      %v129 = vadd.f32 %v128, %v119
      %130 = vst [vmem:[%s127] sm:$0xff] %v129
    $region25: #{tpu_custom_call.1} parent=1 // pred_fallthru
      _
    %p131 = scmp.gt.s32.totalorder %s88, 16
    // Predicated region
    $region26: #{tpu_custom_call.1} parent=1 // pred_check
      %p132 = pneg %p131
    $region27: #{tpu_custom_call.1} parent=1 // pred_check_branch
      %134 = sbr.rel (%p132) target = $region29
    $region28: #{tpu_custom_call.1} parent=1 // pred_region
      %v135 = vlaneseq
      %v136 = vshrl.u32 %v135, 7
      %v137 = vadd.s32 %v136, 8
      %v138 = vstv %s87
      %v139 = vadd.s32 %v136, %v138
      %v140 = vadd.s32 %v137, %v138
      %v141 = vld [vmem:[%s76] sm:$0xff]
      %v142 = vld [vmem:[%s76 + $0x8] sm:$0xff]
      %vm143 = vcmp.ne.s32.totalorder %v141, 0
      %vm144 = vcmp.ne.s32.totalorder %v142, 0
      %vm145 = vcmp.lt.s32.totalorder %v139, 16
      %vm146 = vcmp.lt.s32.totalorder %v140, 16
      %vm147 = vmand %vm143, %vm145
      %vm148 = vmand %vm144, %vm146
      %v149 = vld [vmem:[%s66] sm:$0xff]
      %v150 = vld [vmem:[%s66 + $0x8] sm:$0xff]
      %v151 = vld [vmem:[#allocation2] sm:$0xff]
      %v152 = vld [vmem:[#allocation2 + $0x8] sm:$0xff]
      %v153 = vrcp.pop %v151
      %v154 = vmul.f32 %v149, %v153
      %v155 = vrcp.pop %v152
      %v156 = vmul.f32 %v150, %v155
      %v157 = vsel %vm147, %v154, 1.0
      %v158 = vsel %vm148, %v156, 1.0
      %v159 = vlog2.pop %v157
      %v160 = vmul.f32 %v159, 0.6931472
      %v161 = vlog2.pop %v158
      %v162 = vmul.f32 %v161, 0.6931472
      %v163 = vadd.f32 %v160, %v162
      %v164 = vmul.f32 %v160, %v160
      %v165 = vmul.f32 %v162, %v162
      %v166 = vadd.f32 %v164, %v165
      %v167 = vsel %vm147, 1, 0
      %v168 = vsel %vm148, 1, 0
      %v169 = vcvt.s32.f32 %v167
      %v170 = vcvt.s32.f32 %v168
      %v171 = vadd.f32 %v169, %v170
      %v172 = vld [vmem:[#allocation5] sm:$0xff]
      %v173 = vadd.f32 %v172, %v163
      %174 = vst [vmem:[#allocation5] sm:$0xff] %v173
      %s175 = scalar_lea.vmem [#allocation5], 8
      %v176 = vld [vmem:[%s175] sm:$0xff]
      %v177 = vadd.f32 %v176, %v166
      %178 = vst [vmem:[%s175] sm:$0xff] %v177
      %s179 = scalar_lea.vmem [#allocation5], 16
      %v180 = vld [vmem:[%s179] sm:$0xff]
      %v181 = vadd.f32 %v180, %v171
      %182 = vst [vmem:[%s179] sm:$0xff] %v181
    $region29: #{tpu_custom_call.1} parent=1 // pred_fallthru
      _
    // Predicated region
    $region30: #{tpu_custom_call.1} parent=1 // pred_check
      _
    $region31: #{tpu_custom_call.1} parent=1 // pred_check_branch
      %184 = sbr.rel (0) target = $region33
    $region32: #{tpu_custom_call.1} parent=1 // pred_region
      %s186 = ssub.s32 384, 384
      %187 = vsyncadd [#allocation4], %s186
      %s188 = sshll.u32 [#allocation5], 4
      %s189 = int_to_ptr.vmem [resolvable:$true] %s188
      %194 = dma.vmem_to_hbm [thread:$0]  %s189, 384, %s3, [#allocation4], 128, 128, 8
    $region33: #{tpu_custom_call.1} parent=1 // pred_fallthru
      _
    // Predicated region
    $region34: #{tpu_custom_call.1} parent=1 // pred_check
      _
    $region35: #{tpu_custom_call.1} parent=1 // pred_check_branch
      %196 = sbr.rel (0) target = $region37
    $region36: #{tpu_custom_call.1} parent=1 // pred_region
      %197 = dma.done [#allocation4], 384
    $region37: #{tpu_custom_call.1} parent=1 // pred_fallthru
      _
    %198 = vsyncpa [#allocation3], 1
    %199 = vsyncpa [#allocation4], 1

</llo_original>
